<compile_context>
chip_gen: v5e
topology: v5e:2x2
jax: 0.10.0
libtpu: 0.0.40
codegen_flags: <defaults>
</compile_context>

<pallas_src>
import functools

import jax
import jax.numpy as jnp
from jax import lax
from jax.experimental import pallas as pl
from jax.experimental.pallas import tpu as pltpu


def _round_up(x: int, m: int) -> int:
    return ((x + m - 1) // m) * m


def _cos_loss_kernel(a_ref, b_ref, c_ref, d_ref, y_ref, out_ref, *, margin, eps):
    # Differences ("output1" / "output2" of the torch module), upcast to f32.
    u = a_ref[...].astype(jnp.float32) - b_ref[...].astype(jnp.float32)   # [TB, D]
    v = c_ref[...].astype(jnp.float32) - d_ref[...].astype(jnp.float32)   # [TB, D]

    # Row-wise cosine similarity.  torch clamps each norm to eps separately:
    #   cos = dot / (max(||u||, eps) * max(||v||, eps))
    # which equals dot * rsqrt(max(nu, eps^2) * max(nv, eps^2)).
    dot = jnp.sum(u * v, axis=-1, keepdims=True)                          # [TB, 1]
    nu = jnp.sum(u * u, axis=-1, keepdims=True)                           # [TB, 1]
    nv = jnp.sum(v * v, axis=-1, keepdims=True)                           # [TB, 1]
    eps2 = eps * eps
    inv_denom = lax.rsqrt(jnp.maximum(nu, eps2) * jnp.maximum(nv, eps2))  # EUP
    cos = dot * inv_denom                                                 # [TB, 1]

    # CosineEmbeddingLoss:  y=+1 -> 1 - cos ;  y=-1 -> max(0, cos - margin)
    y = y_ref[...]                                                        # [TB, 1]
    per_row = jnp.where(y > 0.0, 1.0 - cos, jnp.maximum(cos - margin, 0.0))

    # Per-tile partial sum, broadcast into a lane-dense (8, 128) output block
    # (unmasked vst; final reduction / mean happens in plain JAX).
    tile_sum = jnp.sum(per_row)
    out_ref[...] = jnp.broadcast_to(tile_sum, out_ref.shape)


def _pick_block_rows(B: int, D: int, itemsize: int) -> int:
    # Target ~1 MiB per embedding block; double-buffered x4 inputs stays < ~10 MiB.
    target_bytes = 1 << 20
    rows = max(8, target_bytes // max(1, D * itemsize))
    rows = min(rows, 512)                      # conservative cap (v7x has 64 MiB VMEM)
    rows = max(8, (rows // 8) * 8)             # sublane multiple
    rows = min(rows, _round_up(B, 8))          # don't exceed (padded) batch
    return rows


def cos_loss(rep_a, rep_b, rep_c, rep_d, labels, *, margin=0.0, eps=1e-8,
             block_rows=None):
    """Pallas implementation of CosLoss.forward (with labels provided)."""
    B, D = rep_a.shape
    itemsize = jnp.dtype(rep_a.dtype).itemsize
    TB = block_rows if block_rows is not None else _pick_block_rows(B, D, itemsize)
    TB = max(8, (min(TB, _round_up(B, 8)) // 8) * 8)

    B_pad = _round_up(B, TB)
    n_tiles = B_pad // TB
    pad = B_pad - B

    def pad_rows(x):
        return jnp.pad(x, ((0, pad), (0, 0))) if pad else x

    a, b, c, d = (pad_rows(x) for x in (rep_a, rep_b, rep_c, rep_d))
    y = labels.reshape(-1).astype(jnp.float32)
    if pad:
        # Pad rows: u = v = 0 -> cos = 0; with label -1 they contribute
        # max(-margin, 0) each, which we subtract exactly below.
        y = jnp.concatenate([y, jnp.full((pad,), -1.0, jnp.float32)])
    y2 = y.reshape(B_pad, 1)

    kernel = functools.partial(_cos_loss_kernel, margin=float(margin), eps=float(eps))

    emb_spec = pl.BlockSpec((TB, D), lambda i: (i, 0))
    partials = pl.pallas_call(
        kernel,
        out_shape=jax.ShapeDtypeStruct((n_tiles * 8, 128), jnp.float32),
        grid=(n_tiles,),
        in_specs=[emb_spec, emb_spec, emb_spec, emb_spec,
                  pl.BlockSpec((TB, 1), lambda i: (i, 0))],
        out_specs=pl.BlockSpec((8, 128), lambda i: (i, 0)),
        compiler_params=pltpu.CompilerParams(
            dimension_semantics=("parallel",),
            vmem_limit_bytes=32 * 1024 * 1024,
        ),
    )(a, b, c, d, y2)

    total = jnp.sum(partials[::8, 0])               # one value per tile
    if pad:
        total = total - pad * max(-float(margin), 0.0)
    return total / B


def _cos_loss_ref(rep_a, rep_b, rep_c, rep_d, labels, margin=0.0, eps=1e-8):
    """Pure-JAX reference mirroring torch.nn.CosineEmbeddingLoss (per-norm eps clamp)."""
    u = rep_a.astype(jnp.float32) - rep_b.astype(jnp.float32)
    v = rep_c.astype(jnp.float32) - rep_d.astype(jnp.float32)
    dot = jnp.sum(u * v, axis=-1)
    nu = jnp.maximum(jnp.linalg.norm(u, axis=-1), eps)
    nv = jnp.maximum(jnp.linalg.norm(v, axis=-1), eps)
    cos = dot / (nu * nv)
    per = jnp.where(labels > 0, 1.0 - cos, jnp.maximum(cos - margin, 0.0))
    return jnp.mean(per)


if __name__ == "__main__":
    # Small shapes: batch=40 sentence pairs (not a tile multiple, exercises padding),
    # embedding dim=128; block_rows=16 forces a multi-tile grid.
    B, D = 40, 128
    key = jax.random.PRNGKey(0)
    ka, kb, kc, kd, kl = jax.random.split(key, 5)

    # TODO(synk): the SentenceTransformer encoder (self.model) is an external
    # sub-module; its sentence embeddings are generated synthetically here.
    rep_a = jax.random.normal(ka, (B, D), dtype=jnp.float32)
    rep_b = jax.random.normal(kb, (B, D), dtype=jnp.float32)
    rep_c = jax.random.normal(kc, (B, D), dtype=jnp.float32)
    rep_d = jax.random.normal(kd, (B, D), dtype=jnp.float32)
    # CosineEmbeddingLoss labels are +1 / -1.
    labels = jnp.where(jax.random.bernoulli(kl, 0.5, (B,)), 1.0, -1.0).astype(jnp.float32)

    # float32 path
    loss = cos_loss(rep_a, rep_b, rep_c, rep_d, labels, block_rows=16)
    loss = jax.block_until_ready(loss)
    ref = _cos_loss_ref(rep_a, rep_b, rep_c, rep_d, labels)
    assert jnp.allclose(loss, ref, rtol=1e-5, atol=1e-5), (loss, ref)

    # bfloat16 inputs (HBM-bandwidth-bound kernel: half the bytes); upcast happens in-kernel.
    a16, b16, c16, d16 = (x.astype(jnp.bfloat16) for x in (rep_a, rep_b, rep_c, rep_d))
    loss16 = cos_loss(a16, b16, c16, d16, labels, block_rows=16)
    loss16 = jax.block_until_ready(loss16)
    ref16 = _cos_loss_ref(a16, b16, c16, d16, labels)
    assert jnp.allclose(loss16, ref16, rtol=1e-4, atol=1e-4), (loss16, ref16)

    print("KERNEL_OK")
</pallas_src>

<mosaic_0001>
module attributes {stable_mosaic.version = 11 : i64} {
  func.func @_cos_loss_kernel(%arg0: i32, %arg1: memref<16x128xf32, #tpu.memory_space<vmem>>, %arg2: memref<16x128xf32, #tpu.memory_space<vmem>>, %arg3: memref<16x128xf32, #tpu.memory_space<vmem>>, %arg4: memref<16x128xf32, #tpu.memory_space<vmem>>, %arg5: memref<16x1xf32, #tpu.memory_space<vmem>>, %arg6: memref<8x128xf32, #tpu.memory_space<vmem>>) attributes {dimension_semantics = [#tpu.dimension_semantics<parallel>], iteration_bounds = array<i64: 3>, scalar_prefetch = 0 : i64, scratch_operands = 0 : i64, tpu.core_type = #tpu.core_type<tc>, window_params = [{transform_indices = @transform_0, window_bounds = array<i64: 16, 128>}, {transform_indices = @transform_1, window_bounds = array<i64: 16, 128>}, {transform_indices = @transform_2, window_bounds = array<i64: 16, 128>}, {transform_indices = @transform_3, window_bounds = array<i64: 16, 128>}, {transform_indices = @transform_4, window_bounds = array<i64: 16, 1>}, {transform_indices = @transform_5, window_bounds = array<i64: 8, 128>}]} {
    %c0 = arith.constant 0 : index
    %c0_0 = arith.constant 0 : index
    %0 = vector.load %arg1[%c0, %c0_0] : memref<16x128xf32, #tpu.memory_space<vmem>>, vector<16x128xf32>
    %c0_1 = arith.constant 0 : index
    %c0_2 = arith.constant 0 : index
    %1 = vector.load %arg2[%c0_1, %c0_2] : memref<16x128xf32, #tpu.memory_space<vmem>>, vector<16x128xf32>
    %2 = arith.subf %0, %1 : vector<16x128xf32>
    %c0_3 = arith.constant 0 : index
    %c0_4 = arith.constant 0 : index
    %3 = vector.load %arg3[%c0_3, %c0_4] : memref<16x128xf32, #tpu.memory_space<vmem>>, vector<16x128xf32>
    %c0_5 = arith.constant 0 : index
    %c0_6 = arith.constant 0 : index
    %4 = vector.load %arg4[%c0_5, %c0_6] : memref<16x128xf32, #tpu.memory_space<vmem>>, vector<16x128xf32>
    %5 = arith.subf %3, %4 : vector<16x128xf32>
    %6 = arith.mulf %2, %5 : vector<16x128xf32>
    %cst = arith.constant dense<0.000000e+00> : vector<16xf32>
    %7 = vector.multi_reduction <add>, %6, %cst [1] : vector<16x128xf32> to vector<16xf32>
    %8 = vector.shape_cast %7 : vector<16xf32> to vector<16x1xf32>
    %9 = arith.mulf %2, %2 : vector<16x128xf32>
    %cst_7 = arith.constant dense<0.000000e+00> : vector<16xf32>
    %10 = vector.multi_reduction <add>, %9, %cst_7 [1] : vector<16x128xf32> to vector<16xf32>
    %11 = vector.shape_cast %10 : vector<16xf32> to vector<16x1xf32>
    %12 = arith.mulf %5, %5 : vector<16x128xf32>
    %cst_8 = arith.constant dense<0.000000e+00> : vector<16xf32>
    %13 = vector.multi_reduction <add>, %12, %cst_8 [1] : vector<16x128xf32> to vector<16xf32>
    %14 = vector.shape_cast %13 : vector<16xf32> to vector<16x1xf32>
    %cst_9 = arith.constant 1.000000e-16 : f32
    %15 = vector.broadcast %cst_9 : f32 to vector<16x1xf32>
    %16 = arith.maximumf %11, %15 : vector<16x1xf32>
    %cst_10 = arith.constant 1.000000e-16 : f32
    %17 = vector.broadcast %cst_10 : f32 to vector<16x1xf32>
    %18 = arith.maximumf %14, %17 : vector<16x1xf32>
    %19 = arith.mulf %16, %18 : vector<16x1xf32>
    %20 = math.rsqrt %19 : vector<16x1xf32>
    %21 = arith.mulf %8, %20 : vector<16x1xf32>
    %c0_11 = arith.constant 0 : index
    %c0_12 = arith.constant 0 : index
    %22 = vector.load %arg5[%c0_11, %c0_12] : memref<16x1xf32, #tpu.memory_space<vmem>>, vector<16x1xf32>
    %cst_13 = arith.constant 0.000000e+00 : f32
    %23 = vector.broadcast %cst_13 : f32 to vector<16x1xf32>
    %24 = arith.cmpf ogt, %22, %23 : vector<16x1xf32>
    %cst_14 = arith.constant 1.000000e+00 : f32
    %25 = vector.broadcast %cst_14 : f32 to vector<16x1xf32>
    %26 = arith.subf %25, %21 : vector<16x1xf32>
    %cst_15 = arith.constant 0.000000e+00 : f32
    %27 = vector.broadcast %cst_15 : f32 to vector<16x1xf32>
    %28 = arith.subf %21, %27 : vector<16x1xf32>
    %cst_16 = arith.constant 0.000000e+00 : f32
    %29 = vector.broadcast %cst_16 : f32 to vector<16x1xf32>
    %30 = arith.maximumf %28, %29 : vector<16x1xf32>
    %31 = arith.select %24, %26, %30 : vector<16x1xi1>, vector<16x1xf32>
    %32 = vector.shape_cast %31 : vector<16x1xf32> to vector<1x16x1xf32>
    %cst_17 = arith.constant dense<0.000000e+00> : vector<1xf32>
    %33 = vector.multi_reduction <add>, %32, %cst_17 [1, 2] : vector<1x16x1xf32> to vector<1xf32>
    %34 = vector.shape_cast %33 : vector<1xf32> to vector<1x1x1xf32>
    %35 = vector.extract %34[0, 0, 0] : f32 from vector<1x1x1xf32>
    %36 = vector.broadcast %35 : f32 to vector<8x128xf32>
    %c0_18 = arith.constant 0 : index
    %c0_19 = arith.constant 0 : index
    %37 = vector.load %arg6[%c0_18, %c0_19] : memref<8x128xf32, #tpu.memory_space<vmem>>, vector<8x128xf32>
    tpu.vector_store %arg6[%c0_18, %c0_19], %36 {strides = array<i32>} : memref<8x128xf32, #tpu.memory_space<vmem>>, vector<8x128xf32>,
    return
  }
  func.func @transform_0(%arg0: i32) -> (i32, i32) {
    %c0_i32 = arith.constant 0 : i32
    %c0_i32_0 = arith.constant 0 : i32
    return %arg0, %c0_i32 : i32, i32
  }
  func.func @transform_1(%arg0: i32) -> (i32, i32) {
    %c0_i32 = arith.constant 0 : i32
    %c0_i32_0 = arith.constant 0 : i32
    return %arg0, %c0_i32 : i32, i32
  }
  func.func @transform_2(%arg0: i32) -> (i32, i32) {
    %c0_i32 = arith.constant 0 : i32
    %c0_i32_0 = arith.constant 0 : i32
    return %arg0, %c0_i32 : i32, i32
  }
  func.func @transform_3(%arg0: i32) -> (i32, i32) {
    %c0_i32 = arith.constant 0 : i32
    %c0_i32_0 = arith.constant 0 : i32
    return %arg0, %c0_i32 : i32, i32
  }
  func.func @transform_4(%arg0: i32) -> (i32, i32) {
    %c0_i32 = arith.constant 0 : i32
    %c0_i32_0 = arith.constant 0 : i32
    return %arg0, %c0_i32 : i32, i32
  }
  func.func @transform_5(%arg0: i32) -> (i32, i32) {
    %c0_i32 = arith.constant 0 : i32
    %c0_i32_0 = arith.constant 0 : i32
    return %arg0, %c0_i32 : i32, i32
  }
}

</mosaic_0001>

<llo_original>
// kernel: tpu_custom_call.1
$region0: #{tpu_custom_call.1}
  #allocation0 [shape = 'u32[]', space=smem, size = 0x4, offset = 0x4, fixed_abs, tag = 'smem constant byte address 0x4 - core index']
  #allocation1 [shape = 'u32[72,128]{1,0:T(1,128)}', space=vmem, size = 0x9000, scoped, tag = 'internal scratch']
  %s0 = inlined_call_operand.vmem [shape: f32[48,128], index: 0, kind: input, shape index: {}]
  %s1 = inlined_call_operand.hbm [shape: f32[48,128], index: 1, kind: input, shape index: {}]
  %s2 = inlined_call_operand.hbm [shape: f32[48,128], index: 2, kind: input, shape index: {}]
  %s3 = inlined_call_operand.hbm [shape: f32[48,128], index: 3, kind: input, shape index: {}]
  %s4 = inlined_call_operand.vmem [shape: f32[48,1], index: 4, kind: input, shape index: {}]
  %s5 = inlined_call_operand.hbm [shape: f32[24,128], index: 5, kind: output, shape index: {}]
  %s6 = sld [smem:[#allocation0]]
  $region65: #{tpu_custom_call.1} parent=0
    _
  %s8 = ssub.s32 1, %s6
  %s9 = scalar_select 0, %s8, %s6
  $region1: #{tpu_custom_call.1} parent=0
    #allocation2 [shape = 'u8[16384]{0}', space=vmem, size = 0x4000, scoped, tag = 'input window, operand 1']
    #allocation3 [shape = 's32[2]{0}', space=sflag, size = 0x8, scoped, tag = 'scoped memory for tpu_custom_call.1']
    #allocation4 [shape = 's32[2]{0}', space=sflag, size = 0x8, scoped, tag = 'scoped memory for tpu_custom_call.1']
    #allocation5 [shape = 'u8[16384]{0}', space=vmem, size = 0x4000, scoped, tag = 'input window, operand 2']
    #allocation6 [shape = 's32[2]{0}', space=sflag, size = 0x8, scoped, tag = 'scoped memory for tpu_custom_call.1']
    #allocation7 [shape = 'u8[16384]{0}', space=vmem, size = 0x4000, scoped, tag = 'input window, operand 3']
    #allocation8 [shape = 'u8[8192]{0}', space=vmem, size = 0x2000, scoped, tag = 'output window, operand 0']
    %10 = vsyncpa [#allocation3], 0
    %s11 = scalar_lea.sflag [#allocation3], 1
    %12 = vsyncpa %s11, 0
    %13 = vsyncpa [#allocation6], 0
    %s14 = scalar_lea.sflag [#allocation6], 1
    %15 = vsyncpa %s14, 0
    %16 = vsyncpa [#allocation4], 0
    %s17 = scalar_lea.sflag [#allocation4], 1
    %18 = vsyncpa %s17, 0
    loop: start=0, step=1, limit=5
    $region2: #{tpu_custom_call.1} parent=1 // loop_pre_header
      _
    $region3: #{tpu_custom_call.1} parent=1 // loop_header
      %s20 = sphi 0, %s24
      %p21 = scmp.ge.s32.totalorder %s20, 5
      %s30 = sphi 0, %s32
      %s33 = sphi 0, %s30
      %s34 = sphi 0, %s33
      %s50 = sphi 0, %s34
      %s56 = sphi 0, %s58
      %s59 = sphi 0, %s56
      %s60 = sphi 0, %s59
      %s76 = sphi 0, %s60
      %s82 = sphi 0, %s84
      %s85 = sphi 0, %s82
      %s86 = sphi 0, %s85
      %s102 = sphi 0, %s86
      %s108 = sphi 0, %s110
      %s111 = sphi 0, %s108
      %s112 = sphi 0, %s111
      %s128 = sphi 0, %s112
      %s134 = sphi 0, %s136
      %s137 = sphi 0, %s134
      %s138 = sphi 0, %s137
      %s154 = sphi 0, %s138
      %s160 = sphi 0, %s162
      %s163 = sphi 0, %s160
      %s164 = sphi 0, %s163
      %s180 = sphi 0, %s164
    $region4: #{tpu_custom_call.1} parent=1 // loop_header_branch
      %23 = sbr.rel (%p21) target = $region8
    $region5: #{tpu_custom_call.1} parent=1 // loop_body
      %s25 = ssub.s32 %s20, 1
      %s26 = ssub.s32 %s20, 2
      %s27 = sadd.s32 %s20, 1
      %s28 = ssub.s32 %s20, %s27
      %p29 = scmp.eq.s32.totalorder %s28, 0
      %s31 = sadd.s32 %s30, 1
      %s32 = scalar_select %p29, %s30, %s31
      %p35 = pneg %p29
      %p36 = scmp.eq.s32.totalorder %s20, 2
      %p37 = por %p35, %p36
      %p38 = scmp.ne.s32.totalorder %s30, %s33
      %p39 = scmp.eq.s32.totalorder %s20, 0
      %p40 = por %p38, %p39
      %p41 = scmp.ne.s32.totalorder %s30, %s33
      %p42 = scmp.eq.s32.totalorder %s25, 2
      %p43 = por %p41, %p42
      %p44 = scmp.ne.s32.totalorder %s33, %s34
      %p45 = scmp.eq.s32.totalorder %s25, 0
      %p46 = por %p44, %p45
      %p47 = scmp.ne.s32.totalorder %s33, %s34
      %p48 = scmp.eq.s32.totalorder %s26, 2
      %p49 = por %p47, %p48
      %p51 = scmp.ne.s32.totalorder %s34, %s50
      %p52 = scmp.eq.s32.totalorder %s26, 0
      %p53 = por %p51, %p52
      %s54 = ssub.s32 %s20, %s27
      %p55 = scmp.eq.s32.totalorder %s54, 0
      %s57 = sadd.s32 %s56, 1
      %s58 = scalar_select %p55, %s56, %s57
      %p61 = pneg %p55
      %p62 = scmp.eq.s32.totalorder %s20, 2
      %p63 = por %p61, %p62
      %p64 = scmp.ne.s32.totalorder %s56, %s59
      %p65 = scmp.eq.s32.totalorder %s20, 0
      %p66 = por %p64, %p65
      %p67 = scmp.ne.s32.totalorder %s56, %s59
      %p68 = scmp.eq.s32.totalorder %s25, 2
      %p69 = por %p67, %p68
      %p70 = scmp.ne.s32.totalorder %s59, %s60
      %p71 = scmp.eq.s32.totalorder %s25, 0
      %p72 = por %p70, %p71
      %p73 = scmp.ne.s32.totalorder %s59, %s60
      %p74 = scmp.eq.s32.totalorder %s26, 2
      %p75 = por %p73, %p74
      %p77 = scmp.ne.s32.totalorder %s60, %s76
      %p78 = scmp.eq.s32.totalorder %s26, 0
      %p79 = por %p77, %p78
      %s80 = ssub.s32 %s20, %s27
      %p81 = scmp.eq.s32.totalorder %s80, 0
      %s83 = sadd.s32 %s82, 1
      %s84 = scalar_select %p81, %s82, %s83
      %p87 = pneg %p81
      %p88 = scmp.eq.s32.totalorder %s20, 2
      %p89 = por %p87, %p88
      %p90 = scmp.ne.s32.totalorder %s82, %s85
      %p91 = scmp.eq.s32.totalorder %s20, 0
      %p92 = por %p90, %p91
      %p93 = scmp.ne.s32.totalorder %s82, %s85
      %p94 = scmp.eq.s32.totalorder %s25, 2
      %p95 = por %p93, %p94
      %p96 = scmp.ne.s32.totalorder %s85, %s86
      %p97 = scmp.eq.s32.totalorder %s25, 0
      %p98 = por %p96, %p97
      %p99 = scmp.ne.s32.totalorder %s85, %s86
      %p100 = scmp.eq.s32.totalorder %s26, 2
      %p101 = por %p99, %p100
      %p103 = scmp.ne.s32.totalorder %s86, %s102
      %p104 = scmp.eq.s32.totalorder %s26, 0
      %p105 = por %p103, %p104
      %s106 = ssub.s32 %s20, %s27
      %p107 = scmp.eq.s32.totalorder %s106, 0
      %s109 = sadd.s32 %s108, 1
      %s110 = scalar_select %p107, %s108, %s109
      %p113 = pneg %p107
      %p114 = scmp.eq.s32.totalorder %s20, 2
      %p115 = por %p113, %p114
      %p116 = scmp.ne.s32.totalorder %s108, %s111
      %p117 = scmp.eq.s32.totalorder %s20, 0
      %p118 = por %p116, %p117
      %p119 = scmp.ne.s32.totalorder %s108, %s111
      %p120 = scmp.eq.s32.totalorder %s25, 2
      %p121 = por %p119, %p120
      %p122 = scmp.ne.s32.totalorder %s111, %s112
      %p123 = scmp.eq.s32.totalorder %s25, 0
      %p124 = por %p122, %p123
      %p125 = scmp.ne.s32.totalorder %s111, %s112
      %p126 = scmp.eq.s32.totalorder %s26, 2
      %p127 = por %p125, %p126
      %p129 = scmp.ne.s32.totalorder %s112, %s128
      %p130 = scmp.eq.s32.totalorder %s26, 0
      %p131 = por %p129, %p130
      %s132 = ssub.s32 %s20, %s27
      %p133 = scmp.eq.s32.totalorder %s132, 0
      %s135 = sadd.s32 %s134, 1
      %s136 = scalar_select %p133, %s134, %s135
      %p139 = pneg %p133
      %p140 = scmp.eq.s32.totalorder %s20, 2
      %p141 = por %p139, %p140
      %p142 = scmp.ne.s32.totalorder %s134, %s137
      %p143 = scmp.eq.s32.totalorder %s20, 0
      %p144 = por %p142, %p143
      %p145 = scmp.ne.s32.totalorder %s134, %s137
      %p146 = scmp.eq.s32.totalorder %s25, 2
      %p147 = por %p145, %p146
      %p148 = scmp.ne.s32.totalorder %s137, %s138
      %p149 = scmp.eq.s32.totalorder %s25, 0
      %p150 = por %p148, %p149
      %p151 = scmp.ne.s32.totalorder %s137, %s138
      %p152 = scmp.eq.s32.totalorder %s26, 2
      %p153 = por %p151, %p152
      %p155 = scmp.ne.s32.totalorder %s138, %s154
      %p156 = scmp.eq.s32.totalorder %s26, 0
      %p157 = por %p155, %p156
      %s158 = ssub.s32 %s20, %s27
      %p159 = scmp.eq.s32.totalorder %s158, 0
      %s161 = sadd.s32 %s160, 1
      %s162 = scalar_select %p159, %s160, %s161
      %p165 = pneg %p159
      %p166 = scmp.eq.s32.totalorder %s20, 2
      %p167 = por %p165, %p166
      %p168 = scmp.ne.s32.totalorder %s160, %s163
      %p169 = scmp.eq.s32.totalorder %s20, 0
      %p170 = por %p168, %p169
      %p171 = scmp.ne.s32.totalorder %s160, %s163
      %p172 = scmp.eq.s32.totalorder %s25, 2
      %p173 = por %p171, %p172
      %p174 = scmp.ne.s32.totalorder %s163, %s164
      %p175 = scmp.eq.s32.totalorder %s25, 0
      %p176 = por %p174, %p175
      %p177 = scmp.ne.s32.totalorder %s163, %s164
      %p178 = scmp.eq.s32.totalorder %s26, 2
      %p179 = por %p177, %p178
      %p181 = scmp.ne.s32.totalorder %s164, %s180
      %p182 = scmp.eq.s32.totalorder %s26, 0
      %p183 = por %p181, %p182
      %p184 = scmp.le.s32.totalorder 1, %s20
      %p185 = scmp.lt.s32.totalorder %s20, 4
      %p186 = pnand %p184, %p185
      %p187 = pneg %p186
      // Predicated region
      $region9: #{tpu_custom_call.1} parent=5 // pred_check
        _
      $region10: #{tpu_custom_call.1} parent=5 // pred_check_branch
        %189 = sbr.rel (%p186) target = $region12
      $region11: #{tpu_custom_call.1} parent=5 // pred_region
        %s190 = ssub.s32 %s20, 1
      $region12: #{tpu_custom_call.1} parent=5 // pred_fallthru
        _
      %p191 = scmp.lt.s32.totalorder %s20, 3
      // Predicated region
      $region13: #{tpu_custom_call.1} parent=5 // pred_check
        %p192 = pneg %p191
      $region14: #{tpu_custom_call.1} parent=5 // pred_check_branch
        %194 = sbr.rel (%p192) target = $region16
      $region15: #{tpu_custom_call.1} parent=5 // pred_region
        // Predicated region
        $region17: #{tpu_custom_call.1} parent=15 // pred_check
          %p195 = pneg %p40
        $region18: #{tpu_custom_call.1} parent=15 // pred_check_branch
          %197 = sbr.rel (%p195) target = $region20
        $region19: #{tpu_custom_call.1} parent=15 // pred_region
          %s198 = smul.u32 2, %s20
          %p199 = scmp.lt.s32.totalorder %s198, 5
          %s200 = scalar_select %p199, %s198, 5
          %s201 = smul.addr %s200, 8
          %s202 = scalar_lea.vmem %s0, %s201
          %s203 = smul.u32 2, %s20
        $region20: #{tpu_custom_call.1} parent=15 // pred_fallthru
          _
        // Predicated region
        $region21: #{tpu_custom_call.1} parent=15 // pred_check
          %p204 = pneg %p66
        $region22: #{tpu_custom_call.1} parent=15 // pred_check_branch
          %206 = sbr.rel (%p204) target = $region24
        $region23: #{tpu_custom_call.1} parent=15 // pred_region
          %s207 = sand.u32 %s56, 1
          %s208 = scalar_lea.sflag [#allocation3], %s207
          %s209 = sand.u32 %s56, 1
          %s210 = smul.addr %s209, 16
          %s211 = scalar_lea.vmem [#allocation2], %s210
          %s212 = smul.u32 2, %s20
          %214 = vsyncadd %s208, 0
          %s215 = smul.addr %s212, 8
          %s216 = scalar_lea.hbm %s1, %s215
          %s217 = sshll.u32 %s216, 4
          %s218 = int_to_ptr.hbm [resolvable:$true] %s217
          %s219 = sshll.u32 %s211, 4
          %s220 = int_to_ptr.vmem [resolvable:$true] %s219
          %225 = dma.hbm_to_vmem [thread:$0]  %s218, 256, %s220, %s208, 128, 128, 8
        $region24: #{tpu_custom_call.1} parent=15 // pred_fallthru
          _
        // Predicated region
        $region25: #{tpu_custom_call.1} parent=15 // pred_check
          %p226 = pneg %p92
        $region26: #{tpu_custom_call.1} parent=15 // pred_check_branch
          %228 = sbr.rel (%p226) target = $region28
        $region27: #{tpu_custom_call.1} parent=15 // pred_region
          %s229 = sand.u32 %s20, 1
          %s230 = scalar_lea.sflag [#allocation6], %s229
          %s231 = sand.u32 %s82, 1
          %s232 = smul.addr %s231, 16
          %s233 = scalar_lea.vmem [#allocation5], %s232
          %s234 = smul.u32 2, %s20
          %236 = vsyncadd %s230, 0
          %s237 = smul.addr %s234, 8
          %s238 = scalar_lea.hbm %s2, %s237
          %s239 = sshll.u32 %s238, 4
          %s240 = int_to_ptr.hbm [resolvable:$true] %s239
          %s241 = sshll.u32 %s233, 4
          %s242 = int_to_ptr.vmem [resolvable:$true] %s241
          %247 = dma.hbm_to_vmem [thread:$0]  %s240, 256, %s242, %s230, 128, 128, 8
        $region28: #{tpu_custom_call.1} parent=15 // pred_fallthru
          _
        // Predicated region
        $region29: #{tpu_custom_call.1} parent=15 // pred_check
          %p248 = pneg %p118
        $region30: #{tpu_custom_call.1} parent=15 // pred_check_branch
          %250 = sbr.rel (%p248) target = $region32
        $region31: #{tpu_custom_call.1} parent=15 // pred_region
          %s251 = sand.u32 %s20, 1
          %s252 = scalar_lea.sflag [#allocation6], %s251
          %s253 = sand.u32 %s108, 1
          %s254 = smul.addr %s253, 16
          %s255 = scalar_lea.vmem [#allocation7], %s254
          %s256 = smul.u32 2, %s20
          %258 = vsyncadd %s252, 0
          %s259 = smul.addr %s256, 8
          %s260 = scalar_lea.hbm %s3, %s259
          %s261 = sshll.u32 %s260, 4
          %s262 = int_to_ptr.hbm [resolvable:$true] %s261
          %s263 = sshll.u32 %s255, 4
          %s264 = int_to_ptr.vmem [resolvable:$true] %s263
          %269 = dma.hbm_to_vmem [thread:$0]  %s262, 256, %s264, %s252, 128, 128, 8
        $region32: #{tpu_custom_call.1} parent=15 // pred_fallthru
          _
        // Predicated region
        $region33: #{tpu_custom_call.1} parent=15 // pred_check
          %p270 = pneg %p144
        $region34: #{tpu_custom_call.1} parent=15 // pred_check_branch
          %272 = sbr.rel (%p270) target = $region36
        $region35: #{tpu_custom_call.1} parent=15 // pred_region
          %s273 = smul.u32 2, %s20
          %p274 = scmp.lt.s32.totalorder %s273, 5
          %s275 = scalar_select %p274, %s273, 5
          %s276 = smul.addr %s275, 8
          %s277 = scalar_lea.vmem %s4, %s276
          %s278 = smul.u32 2, %s20
        $region36: #{tpu_custom_call.1} parent=15 // pred_fallthru
          _
      $region16: #{tpu_custom_call.1} parent=5 // pred_fallthru
        _
      %p279 = scmp.le.s32.totalorder 1, %s20
      %p280 = scmp.lt.s32.totalorder %s20, 4
      %p281 = pnand %p279, %p280
      %p282 = pneg %p281
      // Predicated region
      $region37: #{tpu_custom_call.1} parent=5 // pred_check
        _
      $region38: #{tpu_custom_call.1} parent=5 // pred_check_branch
        %284 = sbr.rel (%p281) target = $region40
      $region39: #{tpu_custom_call.1} parent=5 // pred_region
        %s285 = ssub.s32 %s20, 1
        %s286 = sand.u32 %s59, 1
        %s287 = scalar_lea.sflag [#allocation3], %s286
        %s288 = sand.u32 %s59, 1
        %s289 = smul.addr %s288, 16
        %s290 = scalar_lea.vmem [#allocation2], %s289
        // Predicated region
        $region41: #{tpu_custom_call.1} parent=39 // pred_check
          %p291 = pneg %p72
        $region42: #{tpu_custom_call.1} parent=39 // pred_check_branch
          %293 = sbr.rel (%p291) target = $region44
        $region43: #{tpu_custom_call.1} parent=39 // pred_region
          %295 = dma.done %s287, 256
        $region44: #{tpu_custom_call.1} parent=39 // pred_fallthru
          _
        %s296 = sand.u32 %s25, 1
        %s297 = scalar_lea.sflag [#allocation6], %s296
        %s298 = sand.u32 %s85, 1
        %s299 = smul.addr %s298, 16
        %s300 = scalar_lea.vmem [#allocation5], %s299
        // Predicated region
        $region45: #{tpu_custom_call.1} parent=39 // pred_check
          %p301 = pneg %p98
        $region46: #{tpu_custom_call.1} parent=39 // pred_check_branch
          %303 = sbr.rel (%p301) target = $region48
        $region47: #{tpu_custom_call.1} parent=39 // pred_region
          %305 = dma.done %s297, 256
        $region48: #{tpu_custom_call.1} parent=39 // pred_fallthru
          _
        %s306 = sand.u32 %s25, 1
        %s307 = scalar_lea.sflag [#allocation6], %s306
        %s308 = sand.u32 %s111, 1
        %s309 = smul.addr %s308, 16
        %s310 = scalar_lea.vmem [#allocation7], %s309
        // Predicated region
        $region49: #{tpu_custom_call.1} parent=39 // pred_check
          %p311 = pneg %p124
        $region50: #{tpu_custom_call.1} parent=39 // pred_check_branch
          %313 = sbr.rel (%p311) target = $region52
        $region51: #{tpu_custom_call.1} parent=39 // pred_region
          %315 = dma.done %s307, 256
        $region52: #{tpu_custom_call.1} parent=39 // pred_fallthru
          _
        %s316 = smul.u32 2, %s25
        %p317 = scmp.lt.s32.totalorder %s316, 5
        %s318 = scalar_select %p317, %s316, 5
        %s319 = smul.addr %s318, 8
        %s320 = scalar_lea.vmem %s0, %s319
        %p321 = pneg %p46
        %p322 = pneg %p43
        %s323 = sand.u32 %s59, 1
        %s324 = scalar_lea.sflag [#allocation3], %s323
        %s325 = sand.u32 %s59, 1
        %s326 = smul.addr %s325, 16
        %s327 = scalar_lea.vmem [#allocation2], %s326
        %p328 = pneg %p72
        %p329 = pneg %p69
        %s330 = sand.u32 %s25, 1
        %s331 = scalar_lea.sflag [#allocation6], %s330
        %s332 = sand.u32 %s85, 1
        %s333 = smul.addr %s332, 16
        %s334 = scalar_lea.vmem [#allocation5], %s333
        %p335 = pneg %p98
        %p336 = pneg %p95
        %s337 = sand.u32 %s25, 1
        %s338 = scalar_lea.sflag [#allocation6], %s337
        %s339 = sand.u32 %s111, 1
        %s340 = smul.addr %s339, 16
        %s341 = scalar_lea.vmem [#allocation7], %s340
        %p342 = pneg %p124
        %p343 = pneg %p121
        %s344 = smul.u32 2, %s25
        %p345 = scmp.lt.s32.totalorder %s344, 5
        %s346 = scalar_select %p345, %s344, 5
        %s347 = smul.addr %s346, 8
        %s348 = scalar_lea.vmem %s4, %s347
        %p349 = pneg %p150
        %p350 = pneg %p147
        %p351 = pneg %p176
        %p352 = pneg %p173
        %s353 = sand.u32 %s163, 1
        %s354 = scalar_lea.sflag [#allocation4], %s353
        %s355 = sand.u32 %s163, 1
        %s356 = smul.addr %s355, 8
        %s357 = scalar_lea.vmem [#allocation8], %s356
        %s358 = smul.u32 2, %s25
        %p359 = scmp.lt.s32.totalorder %s358, 5
        %s360 = scalar_select %p359, %s358, 5
        %s361 = smul.addr %s360, 8
        %s362 = scalar_lea.vmem %s0, %s361
        %s363 = smul.u32 2, %s25
        %s364 = smul.u32 2, %s25
        %s365 = smul.u32 2, %s25
        %s366 = smul.u32 2, %s25
        %s367 = smul.u32 2, %s25
        %p368 = scmp.lt.s32.totalorder %s367, 5
        %s369 = scalar_select %p368, %s367, 5
        %s370 = smul.addr %s369, 8
        %s371 = scalar_lea.vmem %s4, %s370
        %s372 = smul.u32 2, %s25
        %v373 = vld [vmem:[%s362] sm:$0xff]
        %v374 = vld [vmem:[%s362 + $0x8] sm:$0xff]
        %v375 = vld [vmem:[%s290] sm:$0xff]
        %v376 = vld [vmem:[%s290 + $0x8] sm:$0xff]
        %v377 = vsub.f32 %v373, %v375
        %v378 = vsub.f32 %v374, %v376
        %v379 = vld [vmem:[%s300] sm:$0xff]
        %v380 = vld [vmem:[%s300 + $0x8] sm:$0xff]
        %v381 = vld [vmem:[%s310] sm:$0xff]
        %v382 = vld [vmem:[%s310 + $0x8] sm:$0xff]
        %v383 = vsub.f32 %v379, %v381
        %v384 = vsub.f32 %v380, %v382
        %v385 = vmul.f32 %v377, %v383
        %v386 = vmul.f32 %v378, %v384
        %387 = vadd.xlane.f32.xlu0 %v385
        %v388 = vpop.xlane.xlu0 %387
        %389 = vadd.xlane.f32.xlu0 %v386
        %v390 = vpop.xlane.xlu0 %389
        %v391 = vmul.f32 %v377, %v377
        %v392 = vmul.f32 %v378, %v378
        %393 = vadd.xlane.f32.xlu0 %v391
        %v394 = vpop.xlane.xlu0 %393
        %395 = vadd.xlane.f32.xlu0 %v392
        %v396 = vpop.xlane.xlu0 %395
        %v397 = vmul.f32 %v383, %v383
        %v398 = vmul.f32 %v384, %v384
        %399 = vadd.xlane.f32.xlu0 %v397
        %v400 = vpop.xlane.xlu0 %399
        %401 = vadd.xlane.f32.xlu0 %v398
        %v402 = vpop.xlane.xlu0 %401
        %v403 = vmax.f32 %v394, 1e-16
        %v404 = vmax.f32 %v396, 1e-16
        %v405 = vmax.f32 %v400, 1e-16
        %v406 = vmax.f32 %v402, 1e-16
        %v407 = vmul.f32 %v403, %v405
        %v408 = vmul.f32 %v404, %v406
        %v409 = vrsqrt.pop %v407
        %v410 = vmul.f32 %v409, %v407
        %v411 = vmul.f32 %v410, %v409
        %v412 = vmul.f32 0.5, %v411
        %v413 = vsub.f32 1.5, %v412
        %v414 = vmul.f32 %v409, %v413
        %vm415 = vweird.f32 %v407
        %vm416 = vweird.f32 %v409
        %vm417 = vmor %vm415, %vm416
        %v418 = vsel %vm417, %v409, %v414
        %v419 = vrsqrt.pop %v408
        %v420 = vmul.f32 %v419, %v408
        %v421 = vmul.f32 %v420, %v419
        %v422 = vmul.f32 0.5, %v421
        %v423 = vsub.f32 1.5, %v422
        %v424 = vmul.f32 %v419, %v423
        %vm425 = vweird.f32 %v408
        %vm426 = vweird.f32 %v419
        %vm427 = vmor %vm425, %vm426
        %v428 = vsel %vm427, %v419, %v424
        %v429 = vmul.f32 %v388, %v418
        %v430 = vmul.f32 %v390, %v428
        %v431 = vld [vmem:[%s371] sm:$0xff]
        %v432 = vld [vmem:[%s371 + $0x8] sm:$0xff]
        %vm433 = vcmp.gt.f32.partialorder %v431, 0.0
        %vm434 = vcmp.gt.f32.partialorder %v432, 0.0
        %v435 = vsub.f32 1.0, %v429
        %v436 = vsub.f32 1.0, %v430
        %v437 = vmax.f32 %v429, 0.0
        %v438 = vmax.f32 %v430, 0.0
        %v439 = vsel %vm433, %v435, %v437
        %v440 = vsel %vm434, %v436, %v438
        %vm441 = vcmask 7168
        %v442 = vsel %vm441, %v439, 0.0
        %v443 = vsel %vm441, %v440, 0.0
        %v444 = vadd.f32 %v442, %v443
        %445 = vadd.xlane.f32.xlu0 %v444
        %v446 = vpop.xlane.xlu0 %445
        %v447 = vrot.slane %v446, 4
        %v448 = vadd.f32 %v446, %v447
        %v449 = vrot.slane %v448, 2
        %v450 = vadd.f32 %v448, %v449
        %v451 = vrot.slane %v450, 1
        %v452 = vadd.f32 %v450, %v451
        %s453 = vtos %v452
        %v454 = vstv %s453
        %455 = vst [vmem:[%s357] sm:$0xff] %v454
        %s456 = sand.u32 %s163, 1
        %s457 = scalar_lea.sflag [#allocation4], %s456
        %s458 = sand.u32 %s163, 1
        %s459 = smul.addr %s458, 8
        %s460 = scalar_lea.vmem [#allocation8], %s459
        // Predicated region
        $region53: #{tpu_custom_call.1} parent=39 // pred_check
          %p461 = pneg %p173
        $region54: #{tpu_custom_call.1} parent=39 // pred_check_branch
          %463 = sbr.rel (%p461) target = $region56
        $region55: #{tpu_custom_call.1} parent=39 // pred_region
          %465 = vsyncadd %s457, 0
          %s466 = smul.addr %s25, 8
          %s467 = scalar_lea.hbm %s5, %s466
          %s469 = sshll.u32 %s460, 4
          %s470 = int_to_ptr.vmem [resolvable:$true] %s469
          %s471 = sshll.u32 %s467, 4
          %s472 = int_to_ptr.hbm [resolvable:$true] %s471
          %474 = dma.vmem_to_hbm [thread:$0]  %s470, 128, %s472, %s457
        $region56: #{tpu_custom_call.1} parent=39 // pred_fallthru
          _
      $region40: #{tpu_custom_call.1} parent=5 // pred_fallthru
        _
      %p475 = scmp.le.s32.totalorder 2, %s20
      // Predicated region
      $region57: #{tpu_custom_call.1} parent=5 // pred_check
        %p476 = pneg %p475
      $region58: #{tpu_custom_call.1} parent=5 // pred_check_branch
        %478 = sbr.rel (%p476) target = $region60
      $region59: #{tpu_custom_call.1} parent=5 // pred_region
        %s479 = ssub.s32 %s20, 2
        // Predicated region
        $region61: #{tpu_custom_call.1} parent=59 // pred_check
          %p480 = pneg %p179
        $region62: #{tpu_custom_call.1} parent=59 // pred_check_branch
          %482 = sbr.rel (%p480) target = $region64
        $region63: #{tpu_custom_call.1} parent=59 // pred_region
          %s483 = sand.u32 %s164, 1
          %s484 = scalar_lea.sflag [#allocation4], %s483
          %s485 = sand.u32 %s164, 1
          %s486 = smul.addr %s485, 8
          %s487 = scalar_lea.vmem [#allocation8], %s486
          %489 = dma.done %s484, 128
        $region64: #{tpu_custom_call.1} parent=59 // pred_fallthru
          _
      $region60: #{tpu_custom_call.1} parent=5 // pred_fallthru
        _
    $region6: #{tpu_custom_call.1} parent=1 // loop_footer
      %s24 = sadd.s32 1, %s20
    $region7: #{tpu_custom_call.1} parent=1 // loop_footer_branch
      %19 = sbr.rel target = $region3
    $region8: #{tpu_custom_call.1} parent=1 // loop_exit
      _
    %490 = vsyncpa [#allocation3], 1
    %s491 = scalar_lea.sflag [#allocation3], 1
    %492 = vsyncpa %s491, 1
    %493 = vsyncpa [#allocation6], 1
    %s494 = scalar_lea.sflag [#allocation6], 1
    %495 = vsyncpa %s494, 1
    %496 = vsyncpa [#allocation4], 1
    %s497 = scalar_lea.sflag [#allocation4], 1
    %498 = vsyncpa %s497, 1

</llo_original>
